<compile_context>
chip_gen: v5e
topology: v5e:2x2
jax: 0.10.0
libtpu: 0.0.40
codegen_flags: <defaults>
</compile_context>

<pallas_src>
import functools

import jax
import jax.numpy as jnp
from jax.experimental import pallas as pl
from jax.experimental.pallas import tpu as pltpu

IN_FEATURES = 10
HIDDEN = 20
OUT_FEATURES = 10
PAD_H = 128  # padded hidden width (lane-dense for the intermediate activation)


def _skip_a_kernel(x_ref, w1_ref, b1_ref, w2_ref, b2_ref, o_ref):
    # x_ref: (tb, 10)  w1_ref: (10, 128)  b1_ref: (1, 128)
    # w2_ref: (128, 10)  b2_ref: (1, 10)  o_ref: (tb, 10)
    x = x_ref[...].astype(jnp.float32)

    # branch1: Linear(10, 20) -> ReLU -> Linear(20, 10), in f32 on the MXU.
    h = jnp.dot(x, w1_ref[...], preferred_element_type=jnp.float32)
    h = jnp.maximum(h + b1_ref[...], 0.0)          # bias broadcast (1,128)->(tb,128)
    y = jnp.dot(h, w2_ref[...], preferred_element_type=jnp.float32)

    # branch2 + branch3 are Identity: skip-add 2 * x.
    o_ref[...] = (y + b2_ref[...] + 2.0 * x).astype(o_ref.dtype)


def _round_up(n: int, m: int) -> int:
    return ((n + m - 1) // m) * m


def prepare_params(w1, b1, w2, b2):
    """Pad/transpose the tiny parameters ONCE (hoisted out of the forward path).

    Args:
      w1: (20, 10) torch-layout weight of Linear(10, 20).
      b1: (20,)    bias of Linear(10, 20).
      w2: (10, 20) torch-layout weight of Linear(20, 10).
      b2: (10,)    bias of Linear(20, 10).
    Returns:
      w1p (10, 128), b1p (1, 128), w2p (128, 10), b2p (1, 10) — all f32,
      padded hidden rows/cols are exactly zero.
    """
    f32 = jnp.float32
    w1p = jnp.zeros((IN_FEATURES, PAD_H), f32).at[:, :HIDDEN].set(w1.T.astype(f32))
    b1p = jnp.zeros((1, PAD_H), f32).at[0, :HIDDEN].set(b1.astype(f32))
    w2p = jnp.zeros((PAD_H, OUT_FEATURES), f32).at[:HIDDEN, :].set(w2.T.astype(f32))
    b2p = b2.astype(f32).reshape(1, OUT_FEATURES)
    return w1p, b1p, w2p, b2p


@functools.partial(jax.jit, static_argnames=("block_b",))
def skip_connection_a(x, w1p, b1p, w2p, b2p, *, block_b: int = 4096):
    """Fused SkipConnectionATest forward: branch1(x) + 2 * x.

    Args:
      x: (B, 10) input.
      w1p, b1p, w2p, b2p: pre-padded params from `prepare_params`.
    Returns:
      (B, 10) output.
    """
    B, F = x.shape
    assert F == IN_FEATURES

    # Tile only the batch axis.  Ragged last block is handled by Pallas
    # (masked partial-block load/store); rows are independent, so correct.
    tb = min(block_b, _round_up(B, 8))
    grid = (pl.cdiv(B, tb),)

    out = pl.pallas_call(
        _skip_a_kernel,
        out_shape=jax.ShapeDtypeStruct((B, OUT_FEATURES), x.dtype),
        grid_spec=pltpu.PrefetchScalarGridSpec(
            num_scalar_prefetch=0,
            grid=grid,
            in_specs=[
                pl.BlockSpec((tb, IN_FEATURES), lambda i: (i, 0)),     # x streams
                pl.BlockSpec((IN_FEATURES, PAD_H), lambda i: (0, 0)),  # W1 resident
                pl.BlockSpec((1, PAD_H), lambda i: (0, 0)),            # b1 resident
                pl.BlockSpec((PAD_H, OUT_FEATURES), lambda i: (0, 0)), # W2 resident
                pl.BlockSpec((1, OUT_FEATURES), lambda i: (0, 0)),     # b2 resident
            ],
            out_specs=pl.BlockSpec((tb, OUT_FEATURES), lambda i: (i, 0)),
        ),
        compiler_params=pltpu.CompilerParams(
            dimension_semantics=("parallel",),
        ),
    )(x, w1p, b1p, w2p, b2p)
    return out


def _reference(x, w1, b1, w2, b2):
    h = jnp.maximum(x @ w1.T + b1, 0.0)
    y = h @ w2.T + b2
    return y + 2.0 * x


if __name__ == "__main__":
    key = jax.random.PRNGKey(0)
    k_x, k_w1, k_b1, k_w2, k_b2, k_x2 = jax.random.split(key, 6)

    # Small shapes consistent with the module's (B, 10) Linear stack.
    B = 64
    x = jax.random.normal(k_x, (B, IN_FEATURES), jnp.float32)
    w1 = jax.random.normal(k_w1, (HIDDEN, IN_FEATURES), jnp.float32) * 0.1
    b1 = jax.random.normal(k_b1, (HIDDEN,), jnp.float32) * 0.1
    w2 = jax.random.normal(k_w2, (OUT_FEATURES, HIDDEN), jnp.float32) * 0.1
    b2 = jax.random.normal(k_b2, (OUT_FEATURES,), jnp.float32) * 0.1

    # Pad parameters once (outside the per-call path).
    w1p, b1p, w2p, b2p = prepare_params(w1, b1, w2, b2)

    out = skip_connection_a(x, w1p, b1p, w2p, b2p)
    out = jax.block_until_ready(out)
    ref = _reference(x, w1, b1, w2, b2)
    assert out.shape == (B, OUT_FEATURES)
    assert jnp.allclose(out, ref, atol=1e-5, rtol=1e-5), "mismatch vs reference (B=64)"

    # Also exercise the multi-block + ragged-last-block path.
    B2 = 1000
    x2 = jax.random.normal(k_x2, (B2, IN_FEATURES), jnp.float32)
    out2 = skip_connection_a(x2, w1p, b1p, w2p, b2p, block_b=256)
    out2 = jax.block_until_ready(out2)
    ref2 = _reference(x2, w1, b1, w2, b2)
    assert out2.shape == (B2, OUT_FEATURES)
    assert jnp.allclose(out2, ref2, atol=1e-5, rtol=1e-5), "mismatch vs reference (ragged)"

    print("KERNEL_OK")
</pallas_src>

<mosaic_0001>
module attributes {stable_mosaic.version = 11 : i64} {
  func.func @_skip_a_kernel(%arg0: i32, %arg1: memref<64x10xf32, #tpu.memory_space<vmem>>, %arg2: memref<10x128xf32, #tpu.memory_space<vmem>>, %arg3: memref<1x128xf32, #tpu.memory_space<vmem>>, %arg4: memref<128x10xf32, #tpu.memory_space<vmem>>, %arg5: memref<1x10xf32, #tpu.memory_space<vmem>>, %arg6: memref<64x10xf32, #tpu.memory_space<vmem>>) attributes {dimension_semantics = [#tpu.dimension_semantics<parallel>], iteration_bounds = array<i64: 1>, scalar_prefetch = 0 : i64, scratch_operands = 0 : i64, tpu.core_type = #tpu.core_type<tc>, window_params = [{transform_indices = @transform_0, window_bounds = array<i64: 64, 10>}, {pipeline_mode = #tpu.pipeline_mode<synchronous>, transform_indices = @transform_1, window_bounds = array<i64: 10, 128>}, {pipeline_mode = #tpu.pipeline_mode<synchronous>, transform_indices = @transform_2, window_bounds = array<i64: 1, 128>}, {pipeline_mode = #tpu.pipeline_mode<synchronous>, transform_indices = @transform_3, window_bounds = array<i64: 128, 10>}, {pipeline_mode = #tpu.pipeline_mode<synchronous>, transform_indices = @transform_4, window_bounds = array<i64: 1, 10>}, {transform_indices = @transform_5, window_bounds = array<i64: 64, 10>}]} {
    %c0 = arith.constant 0 : index
    %c0_0 = arith.constant 0 : index
    %0 = vector.load %arg1[%c0, %c0_0] : memref<64x10xf32, #tpu.memory_space<vmem>>, vector<64x10xf32>
    %c0_1 = arith.constant 0 : index
    %c0_2 = arith.constant 0 : index
    %1 = vector.load %arg2[%c0_1, %c0_2] : memref<10x128xf32, #tpu.memory_space<vmem>>, vector<10x128xf32>
    %cst = arith.constant dense<0.000000e+00> : vector<64x128xf32>
    %2 = tpu.matmul %0, %1, %cst {dimension_numbers = #tpu.dot_dimension_numbers<[1], [0], [0], [1], [0, 0, 1, 1], [], []>} : vector<64x10xf32>, vector<10x128xf32>, vector<64x128xf32> -> vector<64x128xf32>
    %c0_3 = arith.constant 0 : index
    %c0_4 = arith.constant 0 : index
    %3 = vector.load %arg3[%c0_3, %c0_4] : memref<1x128xf32, #tpu.memory_space<vmem>>, vector<1x128xf32>
    %4 = vector.broadcast %3 : vector<1x128xf32> to vector<64x128xf32>
    %5 = arith.addf %2, %4 : vector<64x128xf32>
    %cst_5 = arith.constant 0.000000e+00 : f32
    %6 = vector.broadcast %cst_5 : f32 to vector<64x128xf32>
    %7 = arith.maximumf %5, %6 : vector<64x128xf32>
    %c0_6 = arith.constant 0 : index
    %c0_7 = arith.constant 0 : index
    %8 = vector.load %arg4[%c0_6, %c0_7] : memref<128x10xf32, #tpu.memory_space<vmem>>, vector<128x10xf32>
    %cst_8 = arith.constant dense<0.000000e+00> : vector<64x10xf32>
    %9 = tpu.matmul %7, %8, %cst_8 {dimension_numbers = #tpu.dot_dimension_numbers<[1], [0], [0], [1], [0, 0, 1, 1], [], []>} : vector<64x128xf32>, vector<128x10xf32>, vector<64x10xf32> -> vector<64x10xf32>
    %c0_9 = arith.constant 0 : index
    %c0_10 = arith.constant 0 : index
    %10 = vector.load %arg5[%c0_9, %c0_10] : memref<1x10xf32, #tpu.memory_space<vmem>>, vector<1x10xf32>
    %11 = vector.broadcast %10 : vector<1x10xf32> to vector<64x10xf32>
    %12 = arith.addf %9, %11 : vector<64x10xf32>
    %cst_11 = arith.constant 2.000000e+00 : f32
    %13 = vector.broadcast %cst_11 : f32 to vector<64x10xf32>
    %14 = arith.mulf %13, %0 : vector<64x10xf32>
    %15 = arith.addf %12, %14 : vector<64x10xf32>
    %c0_12 = arith.constant 0 : index
    %c0_13 = arith.constant 0 : index
    %16 = vector.load %arg6[%c0_12, %c0_13] : memref<64x10xf32, #tpu.memory_space<vmem>>, vector<64x10xf32>
    tpu.vector_store %arg6[%c0_12, %c0_13], %15 {strides = array<i32>} : memref<64x10xf32, #tpu.memory_space<vmem>>, vector<64x10xf32>,
    return
  }
  func.func @transform_0(%arg0: i32) -> (i32, i32) {
    %c0_i32 = arith.constant 0 : i32
    %c0_i32_0 = arith.constant 0 : i32
    return %arg0, %c0_i32 : i32, i32
  }
  func.func @transform_1(%arg0: i32) -> (i32, i32) {
    %c0_i32 = arith.constant 0 : i32
    %c0_i32_0 = arith.constant 0 : i32
    %c0_i32_1 = arith.constant 0 : i32
    return %c0_i32, %c0_i32_0 : i32, i32
  }
  func.func @transform_2(%arg0: i32) -> (i32, i32) {
    %c0_i32 = arith.constant 0 : i32
    %c0_i32_0 = arith.constant 0 : i32
    %c0_i32_1 = arith.constant 0 : i32
    return %c0_i32, %c0_i32_0 : i32, i32
  }
  func.func @transform_3(%arg0: i32) -> (i32, i32) {
    %c0_i32 = arith.constant 0 : i32
    %c0_i32_0 = arith.constant 0 : i32
    %c0_i32_1 = arith.constant 0 : i32
    return %c0_i32, %c0_i32_0 : i32, i32
  }
  func.func @transform_4(%arg0: i32) -> (i32, i32) {
    %c0_i32 = arith.constant 0 : i32
    %c0_i32_0 = arith.constant 0 : i32
    %c0_i32_1 = arith.constant 0 : i32
    return %c0_i32, %c0_i32_0 : i32, i32
  }
  func.func @transform_5(%arg0: i32) -> (i32, i32) {
    %c0_i32 = arith.constant 0 : i32
    %c0_i32_0 = arith.constant 0 : i32
    return %arg0, %c0_i32 : i32, i32
  }
}

</mosaic_0001>

<llo_original>
// kernel: skip_connection_a.1
$region0: #{skip_connection_a.1}
  #allocation0 [shape = 'u32[]', space=smem, size = 0x4, offset = 0x4, fixed_abs, tag = 'smem constant byte address 0x4 - core index']
  #allocation1 [shape = 'u32[72,128]{1,0:T(1,128)}', space=vmem, size = 0x9000, scoped, tag = 'internal scratch']
  %s0 = inlined_call_operand.vmem [shape: f32[64,10], index: 0, kind: input, shape index: {}]
  %s1 = inlined_call_operand.vmem [shape: f32[10,128], index: 1, kind: input, shape index: {}]
  %s2 = inlined_call_operand.vmem [shape: f32[1,128], index: 2, kind: input, shape index: {}]
  %s3 = inlined_call_operand.vmem [shape: f32[128,10], index: 3, kind: input, shape index: {}]
  %s4 = inlined_call_operand.vmem [shape: f32[1,10], index: 4, kind: input, shape index: {}]
  %s5 = inlined_call_operand.vmem [shape: f32[64,10], index: 5, kind: output, shape index: {}]
  %s6 = sld [smem:[#allocation0]]
  $region30: #{skip_connection_a.1} parent=0
    _
  %s8 = ssub.s32 1, %s6
  %s9 = scalar_select 0, %s8, %s6
  // Predicated region
  $region2: #{skip_connection_a.1} parent=0 // pred_check
    _
  $region3: #{skip_connection_a.1} parent=0 // pred_check_branch
    %11 = sbr.rel (0) target = $region5
  $region4: #{skip_connection_a.1} parent=0 // pred_region
    _
  $region5: #{skip_connection_a.1} parent=0 // pred_fallthru
    _
  // Predicated region
  $region6: #{skip_connection_a.1} parent=0 // pred_check
    _
  $region7: #{skip_connection_a.1} parent=0 // pred_check_branch
    %13 = sbr.rel (0) target = $region9
  $region8: #{skip_connection_a.1} parent=0 // pred_region
    _
  $region9: #{skip_connection_a.1} parent=0 // pred_fallthru
    _
  // Predicated region
  $region10: #{skip_connection_a.1} parent=0 // pred_check
    _
  $region11: #{skip_connection_a.1} parent=0 // pred_check_branch
    %15 = sbr.rel (0) target = $region13
  $region12: #{skip_connection_a.1} parent=0 // pred_region
    _
  $region13: #{skip_connection_a.1} parent=0 // pred_fallthru
    _
  // Predicated region
  $region14: #{skip_connection_a.1} parent=0 // pred_check
    _
  $region15: #{skip_connection_a.1} parent=0 // pred_check_branch
    %17 = sbr.rel (0) target = $region17
  $region16: #{skip_connection_a.1} parent=0 // pred_region
    _
  $region17: #{skip_connection_a.1} parent=0 // pred_fallthru
    _
  // Predicated region
  $region18: #{skip_connection_a.1} parent=0 // pred_check
    _
  $region19: #{skip_connection_a.1} parent=0 // pred_check_branch
    %19 = sbr.rel (0) target = $region21
  $region20: #{skip_connection_a.1} parent=0 // pred_region
    _
  $region21: #{skip_connection_a.1} parent=0 // pred_fallthru
    _
  %v20 = vld [vmem:[%s0] sm:$0xff]
  %v21 = vld [vmem:[%s0 + $0x8] sm:$0xff]
  %v22 = vld [vmem:[%s0 + $0x10] sm:$0xff]
  %v23 = vld [vmem:[%s0 + $0x18] sm:$0xff]
  %v24 = vld [vmem:[%s0 + $0x20] sm:$0xff]
  %v25 = vld [vmem:[%s0 + $0x28] sm:$0xff]
  %v26 = vld [vmem:[%s0 + $0x30] sm:$0xff]
  %v27 = vld [vmem:[%s0 + $0x38] sm:$0xff]
  %v28 = vld [vmem:[%s1] sm:$0xff]
  %v29 = vld [vmem:[%s1 + $0x8] sm:$0x3]
  %v30 = vld [vmem:[%s2] sm:$0x1]
  %v32 = vperm.slane %v30, 0
  %vm34 = vcmask 80896
  %v36 = vsel %vm34, %v20, 0
  %v39 = vsel %vm34, %v21, 0
  %v42 = vsel %vm34, %v22, 0
  %v45 = vsel %vm34, %v23, 0
  %v48 = vsel %vm34, %v24, 0
  %v51 = vsel %vm34, %v25, 0
  %v54 = vsel %vm34, %v26, 0
  %v57 = vsel %vm34, %v27, 0
  %vm59 = vcmask 1041408
  %v61 = vsel %vm59, %v29, 0
  %63 = vmatpush.msra.mxu0 0.0
  %64 = vmatpush.msra.mxu0 0.0
  %65 = vmatpush.msra.mxu0 0.0
  %66 = vmatpush.msra.mxu0 0.0
  %67 = vmatpush.msra.mxu0 0.0
  %68 = vmatpush.msra.mxu0 0.0
  %69 = vmatpush.msra.mxu0 0.0
  %70 = vmatpush.msra.mxu0 0.0
  %71 = vmatpush.msra.mxu0 0.0
  %72 = vmatpush.msra.mxu0 0.0
  %73 = vmatpush.msra.mxu0 0.0
  %74 = vmatpush.msra.mxu0 0.0
  %75 = vmatpush.msra.mxu0 0.0
  %76 = vmatpush.msra.mxu0 0.0
  %77 = vmatpush.msra.mxu0 %v61
  %78 = vmatpush.msra.mxu0 %v28
  %79 = vmatmul.f32.gmra.mxu0 %v36
  %v80 = vpop.f32.mrf.mxu0
  %v81 = vadd.f32 %v32, %v80
  %82 = vmatmul.f32.gmra.mxu0 %v39
  %v83 = vpop.f32.mrf.mxu0
  %v84 = vadd.f32 %v32, %v83
  %85 = vmatmul.f32.gmra.mxu0 %v42
  %v86 = vpop.f32.mrf.mxu0
  %v87 = vadd.f32 %v32, %v86
  %88 = vmatmul.f32.gmra.mxu0 %v45
  %v89 = vpop.f32.mrf.mxu0
  %v90 = vadd.f32 %v32, %v89
  %91 = vmatmul.f32.gmra.mxu0 %v48
  %v92 = vpop.f32.mrf.mxu0
  %v93 = vadd.f32 %v32, %v92
  %94 = vmatmul.f32.gmra.mxu0 %v51
  %v95 = vpop.f32.mrf.mxu0
  %v96 = vadd.f32 %v32, %v95
  %97 = vmatmul.f32.gmra.mxu0 %v54
  %v98 = vpop.f32.mrf.mxu0
  %v99 = vadd.f32 %v32, %v98
  %100 = vmatmul.f32.gmra.mxu0 %v57
  %v101 = vpop.f32.mrf.mxu0
  %v102 = vadd.f32 %v32, %v101
  %103 = vdwg.mxu0
  %v104 = vmax.f32 %v81, 0.0
  %v105 = vmax.f32 %v84, 0.0
  %v106 = vmax.f32 %v87, 0.0
  %v107 = vmax.f32 %v90, 0.0
  %v108 = vmax.f32 %v93, 0.0
  %v109 = vmax.f32 %v96, 0.0
  %v110 = vmax.f32 %v99, 0.0
  %v111 = vmax.f32 %v102, 0.0
  %v112 = vld [vmem:[%s3] sm:$0xff]
  %v113 = vld [vmem:[%s3 + $0x8] sm:$0xff]
  %v114 = vld [vmem:[%s3 + $0x10] sm:$0xff]
  %v115 = vld [vmem:[%s3 + $0x18] sm:$0xff]
  %v116 = vld [vmem:[%s3 + $0x20] sm:$0xff]
  %v117 = vld [vmem:[%s3 + $0x28] sm:$0xff]
  %v118 = vld [vmem:[%s3 + $0x30] sm:$0xff]
  %v119 = vld [vmem:[%s3 + $0x38] sm:$0xff]
  %v120 = vld [vmem:[%s3 + $0x40] sm:$0xff]
  %v121 = vld [vmem:[%s3 + $0x48] sm:$0xff]
  %v122 = vld [vmem:[%s3 + $0x50] sm:$0xff]
  %v123 = vld [vmem:[%s3 + $0x58] sm:$0xff]
  %v124 = vld [vmem:[%s3 + $0x60] sm:$0xff]
  %v125 = vld [vmem:[%s3 + $0x68] sm:$0xff]
  %v126 = vld [vmem:[%s3 + $0x70] sm:$0xff]
  %v127 = vld [vmem:[%s3 + $0x78] sm:$0xff]
  %v128 = vld [vmem:[%s4] sm:$0x1]
  %v130 = vperm.slane %v128, 0
  %132 = vmatpush.msra.mxu0 %v127
  %133 = vmatpush.msra.mxu0 %v126
  %134 = vmatpush.msra.mxu0 %v125
  %135 = vmatpush.msra.mxu0 %v124
  %136 = vmatpush.msra.mxu0 %v123
  %137 = vmatpush.msra.mxu0 %v122
  %138 = vmatpush.msra.mxu0 %v121
  %139 = vmatpush.msra.mxu0 %v120
  %140 = vmatpush.msra.mxu0 %v119
  %141 = vmatpush.msra.mxu0 %v118
  %142 = vmatpush.msra.mxu0 %v117
  %143 = vmatpush.msra.mxu0 %v116
  %144 = vmatpush.msra.mxu0 %v115
  %145 = vmatpush.msra.mxu0 %v114
  %146 = vmatpush.msra.mxu0 %v113
  %147 = vmatpush.msra.mxu0 %v112
  %148 = vmatmul.f32.gmra.mxu0 %v104
  %v149 = vpop.f32.mrf.mxu0
  %v150 = vadd.f32 %v130, %v149
  %151 = vmatmul.f32.gmra.mxu0 %v105
  %v152 = vpop.f32.mrf.mxu0
  %v153 = vadd.f32 %v130, %v152
  %154 = vmatmul.f32.gmra.mxu0 %v106
  %v155 = vpop.f32.mrf.mxu0
  %v156 = vadd.f32 %v130, %v155
  %157 = vmatmul.f32.gmra.mxu0 %v107
  %v158 = vpop.f32.mrf.mxu0
  %v159 = vadd.f32 %v130, %v158
  %160 = vmatmul.f32.gmra.mxu0 %v108
  %v161 = vpop.f32.mrf.mxu0
  %v162 = vadd.f32 %v130, %v161
  %163 = vmatmul.f32.gmra.mxu0 %v109
  %v164 = vpop.f32.mrf.mxu0
  %v165 = vadd.f32 %v130, %v164
  %166 = vmatmul.f32.gmra.mxu0 %v110
  %v167 = vpop.f32.mrf.mxu0
  %v168 = vadd.f32 %v130, %v167
  %169 = vmatmul.f32.gmra.mxu0 %v111
  %v170 = vpop.f32.mrf.mxu0
  %v171 = vadd.f32 %v130, %v170
  %172 = vdwg.mxu0
  %v173 = vmul.f32 %v20, 2.0
  %v174 = vmul.f32 %v21, 2.0
  %v175 = vmul.f32 %v22, 2.0
  %v176 = vmul.f32 %v23, 2.0
  %v177 = vmul.f32 %v24, 2.0
  %v178 = vmul.f32 %v25, 2.0
  %v179 = vmul.f32 %v26, 2.0
  %v180 = vmul.f32 %v27, 2.0
  %v181 = vadd.f32 %v150, %v173
  %v182 = vadd.f32 %v153, %v174
  %v183 = vadd.f32 %v156, %v175
  %v184 = vadd.f32 %v159, %v176
  %v185 = vadd.f32 %v162, %v177
  %v186 = vadd.f32 %v165, %v178
  %v187 = vadd.f32 %v168, %v179
  %v188 = vadd.f32 %v171, %v180
  %189 = vst.msk [vmem:[%s5] sm:$0xff] %vm34, %v181
  %190 = vst.msk [vmem:[%s5 + $0x8] sm:$0xff] %vm34, %v182
  %191 = vst.msk [vmem:[%s5 + $0x10] sm:$0xff] %vm34, %v183
  %192 = vst.msk [vmem:[%s5 + $0x18] sm:$0xff] %vm34, %v184
  %193 = vst.msk [vmem:[%s5 + $0x20] sm:$0xff] %vm34, %v185
  %194 = vst.msk [vmem:[%s5 + $0x28] sm:$0xff] %vm34, %v186
  %195 = vst.msk [vmem:[%s5 + $0x30] sm:$0xff] %vm34, %v187
  %196 = vst.msk [vmem:[%s5 + $0x38] sm:$0xff] %vm34, %v188
  // Predicated region
  $region22: #{skip_connection_a.1} parent=0 // pred_check
    _
  $region23: #{skip_connection_a.1} parent=0 // pred_check_branch
    %198 = sbr.rel (0) target = $region25
  $region24: #{skip_connection_a.1} parent=0 // pred_region
    _
  $region25: #{skip_connection_a.1} parent=0 // pred_fallthru
    _
  // Predicated region
  $region26: #{skip_connection_a.1} parent=0 // pred_check
    _
  $region27: #{skip_connection_a.1} parent=0 // pred_check_branch
    %200 = sbr.rel (0) target = $region29
  $region28: #{skip_connection_a.1} parent=0 // pred_region
    _
  $region29: #{skip_connection_a.1} parent=0 // pred_fallthru
    _

</llo_original>
